<compile_context>
chip_gen: v6e
topology: v6e:2x2x1
jax: 0.10.0
libtpu: 0.0.40
codegen_flags: <defaults>
</compile_context>

<pallas_src>
import functools

import jax
import jax.numpy as jnp
from jax.experimental import pallas as pl
from jax.experimental.pallas import tpu as pltpu

NUM_CLASSES = 5
LANE = 128


def _emd_kernel(pred_ref, target_ref, out_ref, *, inv_c):
    # pred_ref:   (5, tile_rows, 128)  float -- classes on leading axis, batch on (sublane, lane)
    # target_ref: (tile_rows, 128)     int32
    # out_ref:    (1, 128)             f32   -- per-lane partial sums of sqrt-EMD for this tile
    tgt = target_ref[...]                                     # (tile_rows, 128)

    cum = jnp.zeros(tgt.shape, jnp.float32)                   # running pred CDF
    acc = jnp.zeros(tgt.shape, jnp.float32)                   # sum over classes of diff^2
    # Unrolled over the 5 classes; pure VPU on full 8x128 vregs, no one-hot built.
    for i in range(NUM_CLASSES):
        cum = cum + pred_ref[i].astype(jnp.float32)           # cdf_pred[:, i]
        step = (tgt <= i).astype(jnp.float32)                 # cdf_target[:, i]
        d = cum - step
        acc = acc + d * d

    # emd = mean over classes, loss = sqrt(emd)  (sqrt goes to the EUP slot).
    loss = jnp.sqrt(acc * inv_c)                              # (tile_rows, 128)
    # Padded samples (pred rows == 0, target == NUM_CLASSES) contribute exactly 0.
    # Sublane reduction -> lane-dense unmasked (1, 128) store.
    out_ref[...] = jnp.sum(loss, axis=0, keepdims=True)


def _round_up(x, m):
    return ((x + m - 1) // m) * m


def emd_loss(pred, target, *, tile_rows=512, pred_dtype=None):
    """pred: (B, 5) float, target: (B,) int class labels in [0, 5). Returns scalar f32."""
    B, C = pred.shape
    assert C == NUM_CLASSES

    # Class-major layout; optional bf16 cast fused into this already-required pass.
    pred_t = jnp.transpose(pred, (1, 0))                      # (5, B)
    if pred_dtype is not None:
        pred_t = pred_t.astype(pred_dtype)
    tgt = target.astype(jnp.int32).reshape(1, B)              # (1, B)

    # Sublane alignment: 8 for 4-byte feeds, 16 for 2-byte (bf16) feeds.
    align = 16 if jnp.dtype(pred_t.dtype).itemsize == 2 else 8

    rows = _round_up(max(B, 1), LANE) // LANE                 # 128-sample rows needed
    tile_rows = max(align, _round_up(min(tile_rows, rows), align))
    # v7x: keep >= 2 grid steps when the batch spans more than one minimal tile,
    # so the "parallel" axis can be sharded across both TensorCores.
    if rows > align:
        tile_rows = min(tile_rows, max(align, _round_up(pl.cdiv(rows, 2), align)))
    rows_pad = _round_up(rows, tile_rows)
    b_pad = rows_pad * LANE
    num_tiles = rows_pad // tile_rows

    if b_pad != B:
        # pred padded with zeros, target with NUM_CLASSES: cdf_pred == cdf_target == 0
        # on padded lanes -> zero loss contribution.
        pred_t = jnp.pad(pred_t, ((0, 0), (0, b_pad - B)))
        tgt = jnp.pad(tgt, ((0, 0), (0, b_pad - B)), constant_values=NUM_CLASSES)

    # Free row-major reshapes into the (R, 128) lane/sublane-dense layout.
    pred_3d = pred_t.reshape(NUM_CLASSES, rows_pad, LANE)
    tgt_2d = tgt.reshape(rows_pad, LANE)

    in_bytes = pred_3d.size * pred_3d.dtype.itemsize + tgt_2d.size * 4
    out_bytes = num_tiles * LANE * 4

    partials = pl.pallas_call(
        functools.partial(_emd_kernel, inv_c=1.0 / NUM_CLASSES),
        out_shape=jax.ShapeDtypeStruct((1, num_tiles * LANE), jnp.float32),
        grid=(num_tiles,),
        in_specs=[
            pl.BlockSpec((NUM_CLASSES, tile_rows, LANE), lambda i: (0, i, 0)),
            pl.BlockSpec((tile_rows, LANE), lambda i: (i, 0)),
        ],
        out_specs=pl.BlockSpec((1, LANE), lambda i: (0, i)),
        compiler_params=pltpu.CompilerParams(
            dimension_semantics=("parallel",)),
        cost_estimate=pl.CostEstimate(
            flops=30 * b_pad,
            transcendentals=b_pad,
            bytes_accessed=in_bytes + out_bytes),
    )(pred_3d, tgt_2d)

    # Each tile wrote 128 per-lane partial sums; tiny final reduction in JAX.
    return jnp.sum(partials) / B


def emd_loss_ref(pred, target):
    onehot = jax.nn.one_hot(target, NUM_CLASSES, dtype=jnp.float32)
    cdf_diff = jnp.cumsum(pred.astype(jnp.float32), axis=1) - jnp.cumsum(onehot, axis=1)
    loss = jnp.sqrt(jnp.mean(cdf_diff ** 2, axis=1))
    return jnp.mean(loss)


if __name__ == "__main__":
    key = jax.random.PRNGKey(0)
    k1, k2, k3, k4 = jax.random.split(key, 4)

    # Small case (single tile, batch padded 8 -> 1024 samples).
    B = 8
    pred = jax.nn.softmax(jax.random.normal(k1, (B, NUM_CLASSES), jnp.float32), axis=1)
    target = jax.random.randint(k2, (B,), 0, NUM_CLASSES, dtype=jnp.int32)
    out = emd_loss(pred, target)
    jax.block_until_ready(out)
    ref = emd_loss_ref(pred, target)
    assert jnp.allclose(out, ref, atol=1e-5, rtol=1e-5), (out, ref)

    # Multi-tile case (exercises the batch grid, padding and partial-sum path).
    B2 = 2100
    pred2 = jax.nn.softmax(jax.random.normal(k3, (B2, NUM_CLASSES), jnp.float32), axis=1)
    target2 = jax.random.randint(k4, (B2,), 0, NUM_CLASSES, dtype=jnp.int32)
    out2 = emd_loss(pred2, target2, tile_rows=8)   # forces multiple grid steps
    jax.block_until_ready(out2)
    ref2 = emd_loss_ref(pred2, target2)
    assert jnp.allclose(out2, ref2, atol=1e-5, rtol=1e-5), (out2, ref2)

    # Optional bf16-feed path (v5e/v6e bandwidth saver); looser tolerance.
    out3 = emd_loss(pred2, target2, tile_rows=16, pred_dtype=jnp.bfloat16)
    jax.block_until_ready(out3)
    assert jnp.allclose(out3, ref2, atol=2e-3, rtol=2e-3), (out3, ref2)

    print("KERNEL_OK")
</pallas_src>

<mosaic_0001>
module attributes {stable_mosaic.version = 11 : i64} {
  func.func @_emd_kernel(%arg0: i32, %arg1: memref<5x8x128xf32, #tpu.memory_space<vmem>>, %arg2: memref<8x128xi32, #tpu.memory_space<vmem>>, %arg3: memref<1x128xf32, #tpu.memory_space<vmem>>) attributes {dimension_semantics = [#tpu.dimension_semantics<parallel>], iteration_bounds = array<i64: 1>, scalar_prefetch = 0 : i64, scratch_operands = 0 : i64, tpu.core_type = #tpu.core_type<tc>, window_params = [{transform_indices = @transform_0, window_bounds = array<i64: 5, 8, 128>}, {transform_indices = @transform_1, window_bounds = array<i64: 8, 128>}, {transform_indices = @transform_2, window_bounds = array<i64: 1, 128>}]} {
    %c0 = arith.constant 0 : index
    %c0_0 = arith.constant 0 : index
    %0 = vector.load %arg2[%c0, %c0_0] : memref<8x128xi32, #tpu.memory_space<vmem>>, vector<8x128xi32>
    %cst = arith.constant 0.000000e+00 : f32
    %1 = vector.broadcast %cst : f32 to vector<8x128xf32>
    %cst_1 = arith.constant 0.000000e+00 : f32
    %2 = vector.broadcast %cst_1 : f32 to vector<8x128xf32>
    %c0_2 = arith.constant 0 : index
    %c0_3 = arith.constant 0 : index
    %c0_4 = arith.constant 0 : index
    %3 = vector.load %arg1[%c0_2, %c0_3, %c0_4] : memref<5x8x128xf32, #tpu.memory_space<vmem>>, vector<1x8x128xf32>
    %4 = vector.shape_cast %3 : vector<1x8x128xf32> to vector<8x128xf32>
    %5 = arith.addf %1, %4 : vector<8x128xf32>
    %c0_i32 = arith.constant 0 : i32
    %6 = vector.broadcast %c0_i32 : i32 to vector<8x128xi32>
    %7 = arith.cmpi sle, %0, %6 : vector<8x128xi32>
    %8 = arith.extui %7 : vector<8x128xi1> to vector<8x128xi32>
    %9 = arith.sitofp %8 : vector<8x128xi32> to vector<8x128xf32>
    %10 = arith.subf %5, %9 : vector<8x128xf32>
    %11 = arith.mulf %10, %10 : vector<8x128xf32>
    %12 = arith.addf %2, %11 : vector<8x128xf32>
    %c1 = arith.constant 1 : index
    %c0_5 = arith.constant 0 : index
    %c0_6 = arith.constant 0 : index
    %13 = vector.load %arg1[%c1, %c0_5, %c0_6] : memref<5x8x128xf32, #tpu.memory_space<vmem>>, vector<1x8x128xf32>
    %14 = vector.shape_cast %13 : vector<1x8x128xf32> to vector<8x128xf32>
    %15 = arith.addf %5, %14 : vector<8x128xf32>
    %c1_i32 = arith.constant 1 : i32
    %16 = vector.broadcast %c1_i32 : i32 to vector<8x128xi32>
    %17 = arith.cmpi sle, %0, %16 : vector<8x128xi32>
    %18 = arith.extui %17 : vector<8x128xi1> to vector<8x128xi32>
    %19 = arith.sitofp %18 : vector<8x128xi32> to vector<8x128xf32>
    %20 = arith.subf %15, %19 : vector<8x128xf32>
    %21 = arith.mulf %20, %20 : vector<8x128xf32>
    %22 = arith.addf %12, %21 : vector<8x128xf32>
    %c2 = arith.constant 2 : index
    %c0_7 = arith.constant 0 : index
    %c0_8 = arith.constant 0 : index
    %23 = vector.load %arg1[%c2, %c0_7, %c0_8] : memref<5x8x128xf32, #tpu.memory_space<vmem>>, vector<1x8x128xf32>
    %24 = vector.shape_cast %23 : vector<1x8x128xf32> to vector<8x128xf32>
    %25 = arith.addf %15, %24 : vector<8x128xf32>
    %c2_i32 = arith.constant 2 : i32
    %26 = vector.broadcast %c2_i32 : i32 to vector<8x128xi32>
    %27 = arith.cmpi sle, %0, %26 : vector<8x128xi32>
    %28 = arith.extui %27 : vector<8x128xi1> to vector<8x128xi32>
    %29 = arith.sitofp %28 : vector<8x128xi32> to vector<8x128xf32>
    %30 = arith.subf %25, %29 : vector<8x128xf32>
    %31 = arith.mulf %30, %30 : vector<8x128xf32>
    %32 = arith.addf %22, %31 : vector<8x128xf32>
    %c3 = arith.constant 3 : index
    %c0_9 = arith.constant 0 : index
    %c0_10 = arith.constant 0 : index
    %33 = vector.load %arg1[%c3, %c0_9, %c0_10] : memref<5x8x128xf32, #tpu.memory_space<vmem>>, vector<1x8x128xf32>
    %34 = vector.shape_cast %33 : vector<1x8x128xf32> to vector<8x128xf32>
    %35 = arith.addf %25, %34 : vector<8x128xf32>
    %c3_i32 = arith.constant 3 : i32
    %36 = vector.broadcast %c3_i32 : i32 to vector<8x128xi32>
    %37 = arith.cmpi sle, %0, %36 : vector<8x128xi32>
    %38 = arith.extui %37 : vector<8x128xi1> to vector<8x128xi32>
    %39 = arith.sitofp %38 : vector<8x128xi32> to vector<8x128xf32>
    %40 = arith.subf %35, %39 : vector<8x128xf32>
    %41 = arith.mulf %40, %40 : vector<8x128xf32>
    %42 = arith.addf %32, %41 : vector<8x128xf32>
    %c4 = arith.constant 4 : index
    %c0_11 = arith.constant 0 : index
    %c0_12 = arith.constant 0 : index
    %43 = vector.load %arg1[%c4, %c0_11, %c0_12] : memref<5x8x128xf32, #tpu.memory_space<vmem>>, vector<1x8x128xf32>
    %44 = vector.shape_cast %43 : vector<1x8x128xf32> to vector<8x128xf32>
    %45 = arith.addf %35, %44 : vector<8x128xf32>
    %c4_i32 = arith.constant 4 : i32
    %46 = vector.broadcast %c4_i32 : i32 to vector<8x128xi32>
    %47 = arith.cmpi sle, %0, %46 : vector<8x128xi32>
    %48 = arith.extui %47 : vector<8x128xi1> to vector<8x128xi32>
    %49 = arith.sitofp %48 : vector<8x128xi32> to vector<8x128xf32>
    %50 = arith.subf %45, %49 : vector<8x128xf32>
    %51 = arith.mulf %50, %50 : vector<8x128xf32>
    %52 = arith.addf %42, %51 : vector<8x128xf32>
    %cst_13 = arith.constant 2.000000e-01 : f32
    %53 = vector.broadcast %cst_13 : f32 to vector<8x128xf32>
    %54 = arith.mulf %52, %53 : vector<8x128xf32>
    %55 = math.sqrt %54 : vector<8x128xf32>
    %cst_14 = arith.constant dense<0.000000e+00> : vector<128xf32>
    %56 = vector.multi_reduction <add>, %55, %cst_14 [0] : vector<8x128xf32> to vector<128xf32>
    %57 = vector.shape_cast %56 : vector<128xf32> to vector<1x128xf32>
    %c0_15 = arith.constant 0 : index
    %c0_16 = arith.constant 0 : index
    %58 = vector.load %arg3[%c0_15, %c0_16] : memref<1x128xf32, #tpu.memory_space<vmem>>, vector<1x128xf32>
    tpu.vector_store %arg3[%c0_15, %c0_16], %57 {strides = array<i32>} : memref<1x128xf32, #tpu.memory_space<vmem>>, vector<1x128xf32>,
    return
  }
  func.func @transform_0(%arg0: i32) -> (i32, i32, i32) {
    %c0_i32 = arith.constant 0 : i32
    %c0_i32_0 = arith.constant 0 : i32
    %c0_i32_1 = arith.constant 0 : i32
    return %c0_i32, %arg0, %c0_i32_0 : i32, i32, i32
  }
  func.func @transform_1(%arg0: i32) -> (i32, i32) {
    %c0_i32 = arith.constant 0 : i32
    %c0_i32_0 = arith.constant 0 : i32
    return %arg0, %c0_i32 : i32, i32
  }
  func.func @transform_2(%arg0: i32) -> (i32, i32) {
    %c0_i32 = arith.constant 0 : i32
    %c0_i32_0 = arith.constant 0 : i32
    return %c0_i32, %arg0 : i32, i32
  }
}

</mosaic_0001>

<llo_original>
// kernel: tpu_custom_call.1
$region0: #{tpu_custom_call.1}
  #allocation0 [shape = 'u32[]', space=smem, size = 0x4, offset = 0x4, fixed_abs, tag = 'smem constant byte address 0x4 - core index']
  #allocation1 [shape = 'u32[144,128]{1,0:T(1,128)}', space=vmem, size = 0x12000, scoped, tag = 'internal scratch']
  %s0 = inlined_call_operand.hbm [shape: f32[5,8,128], index: 0, kind: input, shape index: {}]
  %s1 = inlined_call_operand.hbm [shape: s32[8,128], index: 1, kind: input, shape index: {}]
  %s2 = inlined_call_operand.hbm [shape: f32[1,128], index: 2, kind: output, shape index: {}]
  %s3 = sld [smem:[#allocation0]]
  $region26: #{tpu_custom_call.1} parent=0
    _
  %s5 = ssub.s32 1, %s3
  %s6 = scalar_select 0, %s5, %s3
  $region1: #{tpu_custom_call.1} parent=0
    #allocation2 [shape = 'u8[20480]{0}', space=vmem, size = 0x5000, scoped, tag = 'input window, operand 0, single buffered']
    #allocation3 [shape = 's32[1]{0}', space=sflag, size = 0x4, scoped, tag = 'scoped memory for tpu_custom_call.1']
    #allocation4 [shape = 's32[1]{0}', space=sflag, size = 0x4, scoped, tag = 'scoped memory for tpu_custom_call.1']
    #allocation5 [shape = 'u8[4096]{0}', space=vmem, size = 0x1000, scoped, tag = 'input window, operand 1, single buffered']
    #allocation6 [shape = 's32[1]{0}', space=sflag, size = 0x4, scoped, tag = 'scoped memory for tpu_custom_call.1']
    #allocation7 [shape = 'u8[512]{0}', space=vmem, size = 0x400, scoped, tag = 'output window, operand 0, single buffered']
    %7 = vsyncpa [#allocation3], 0
    %8 = vsyncpa [#allocation6], 0
    %9 = vsyncpa [#allocation4], 0
    // Predicated region
    $region2: #{tpu_custom_call.1} parent=1 // pred_check
      _
    $region3: #{tpu_custom_call.1} parent=1 // pred_check_branch
      %11 = sbr.rel (0) target = $region5
    $region4: #{tpu_custom_call.1} parent=1 // pred_region
      %s13 = ssub.s32 640, 640
      %14 = vsyncadd [#allocation3], %s13
      %s15 = sshll.u32 [#allocation2], 4
      %s16 = int_to_ptr.vmem [resolvable:$true] %s15
      %21 = dma.hbm_to_vmem [thread:$0]  %s0, 640, %s16, [#allocation3], 128, 128, 8
    $region5: #{tpu_custom_call.1} parent=1 // pred_fallthru
      _
    // Predicated region
    $region6: #{tpu_custom_call.1} parent=1 // pred_check
      _
    $region7: #{tpu_custom_call.1} parent=1 // pred_check_branch
      %23 = sbr.rel (0) target = $region9
    $region8: #{tpu_custom_call.1} parent=1 // pred_region
      %s25 = ssub.s32 128, 128
      %26 = vsyncadd [#allocation6], %s25
      %s28 = sshll.u32 [#allocation5], 4
      %s29 = int_to_ptr.vmem [resolvable:$true] %s28
      %31 = dma.hbm_to_vmem [thread:$0]  %s1, 128, %s29, [#allocation6]
    $region9: #{tpu_custom_call.1} parent=1 // pred_fallthru
      _
    // Predicated region
    $region10: #{tpu_custom_call.1} parent=1 // pred_check
      _
    $region11: #{tpu_custom_call.1} parent=1 // pred_check_branch
      %33 = sbr.rel (0) target = $region13
    $region12: #{tpu_custom_call.1} parent=1 // pred_region
      %34 = dma.done [#allocation3], 640
    $region13: #{tpu_custom_call.1} parent=1 // pred_fallthru
      _
    // Predicated region
    $region14: #{tpu_custom_call.1} parent=1 // pred_check
      _
    $region15: #{tpu_custom_call.1} parent=1 // pred_check_branch
      %36 = sbr.rel (0) target = $region17
    $region16: #{tpu_custom_call.1} parent=1 // pred_region
      %37 = dma.done [#allocation6], 128
    $region17: #{tpu_custom_call.1} parent=1 // pred_fallthru
      _
    %v38 = vld [vmem:[#allocation5] sm:$0xff]
    %v39 = vld [vmem:[#allocation2] sm:$0xff]
    %v40 = vadd.f32 %v39, 0.0
    %vm41 = vcmp.le.s32.totalorder %v38, 0
    %v42 = vsel %vm41, 1, 0
    %v43 = vcvt.s32.f32 %v42
    %v44 = vsub.f32 %v40, %v43
    %v45 = vmul.f32 %v44, %v44
    %v46 = vadd.f32 %v45, 0.0
    %s47 = scalar_lea.vmem [#allocation2], 8
    %v48 = vld [vmem:[%s47] sm:$0xff]
    %v49 = vadd.f32 %v40, %v48
    %vm50 = vcmp.le.s32.totalorder %v38, 1
    %v51 = vsel %vm50, 1, 0
    %v52 = vcvt.s32.f32 %v51
    %v53 = vsub.f32 %v49, %v52
    %v54 = vmul.f32 %v53, %v53
    %v55 = vadd.f32 %v46, %v54
    %s56 = scalar_lea.vmem [#allocation2], 16
    %v57 = vld [vmem:[%s56] sm:$0xff]
    %v58 = vadd.f32 %v49, %v57
    %vm59 = vcmp.le.s32.totalorder %v38, 2
    %v60 = vsel %vm59, 1, 0
    %v61 = vcvt.s32.f32 %v60
    %v62 = vsub.f32 %v58, %v61
    %v63 = vmul.f32 %v62, %v62
    %v64 = vadd.f32 %v55, %v63
    %s65 = scalar_lea.vmem [#allocation2], 24
    %v66 = vld [vmem:[%s65] sm:$0xff]
    %v67 = vadd.f32 %v58, %v66
    %vm68 = vcmp.le.s32.totalorder %v38, 3
    %v69 = vsel %vm68, 1, 0
    %v70 = vcvt.s32.f32 %v69
    %v71 = vsub.f32 %v67, %v70
    %v72 = vmul.f32 %v71, %v71
    %v73 = vadd.f32 %v64, %v72
    %s74 = scalar_lea.vmem [#allocation2], 32
    %v75 = vld [vmem:[%s74] sm:$0xff]
    %v76 = vadd.f32 %v67, %v75
    %vm77 = vcmp.le.s32.totalorder %v38, 4
    %v78 = vsel %vm77, 1, 0
    %v79 = vcvt.s32.f32 %v78
    %v80 = vsub.f32 %v76, %v79
    %v81 = vmul.f32 %v80, %v80
    %v82 = vadd.f32 %v73, %v81
    %v83 = vmul.f32 %v82, 0.2
    %v84 = vrsqrt.pop %v83
    %v85 = vmul.f32 %v83, %v84
    %vm86 = vcmp.eq.f32.partialorder %v83, inf
    %v87 = vsel %vm86, %v83, %v85
    %vm88 = vcmp.eq.f32.partialorder %v83, 0.0
    %v89 = vand.u32 %v83, 2147483648
    %v90 = vsel %vm88, %v89, %v87
    %v91 = vrot.slane %v90, 4
    %v92 = vadd.f32 %v90, %v91
    %v93 = vrot.slane %v92, 2
    %v94 = vadd.f32 %v92, %v93
    %v95 = vrot.slane %v94, 1
    %v96 = vadd.f32 %v94, %v95
    %97 = vst [vmem:[#allocation7] sm:$0x1] %v96
    // Predicated region
    $region18: #{tpu_custom_call.1} parent=1 // pred_check
      _
    $region19: #{tpu_custom_call.1} parent=1 // pred_check_branch
      %99 = sbr.rel (0) target = $region21
    $region20: #{tpu_custom_call.1} parent=1 // pred_region
      %s101 = ssub.s32 16, 16
      %102 = vsyncadd [#allocation4], %s101
      %s104 = sshll.u32 [#allocation7], 4
      %s105 = int_to_ptr.vmem [resolvable:$true] %s104
      %107 = dma.vmem_to_hbm [thread:$0]  %s105, 16, %s2, [#allocation4]
    $region21: #{tpu_custom_call.1} parent=1 // pred_fallthru
      _
    // Predicated region
    $region22: #{tpu_custom_call.1} parent=1 // pred_check
      _
    $region23: #{tpu_custom_call.1} parent=1 // pred_check_branch
      %109 = sbr.rel (0) target = $region25
    $region24: #{tpu_custom_call.1} parent=1 // pred_region
      %110 = dma.done [#allocation4], 16
    $region25: #{tpu_custom_call.1} parent=1 // pred_fallthru
      _
    %111 = vsyncpa [#allocation3], 1
    %112 = vsyncpa [#allocation6], 1
    %113 = vsyncpa [#allocation4], 1

</llo_original>
